<compile_context>
chip_gen: v7x
topology: tpu7x:2x2x1
jax: 0.10.0
libtpu: 0.0.40
codegen_flags: <defaults>
</compile_context>

<pallas_src>
import functools

import jax
import jax.numpy as jnp
from jax import lax
from jax.experimental import pallas as pl
from jax.experimental.pallas import tpu as pltpu


def _cls_head_kernel(x_ref, w1_ref, b1_ref, w2_ref, b2_ref, o_ref, acc_ref,
                     *, hw_total, hw_tile, need_mask):
    """One (batch-tile, hw-tile) grid step.

    x_ref : (tb, C, hw_tile) slab of the native NCHW input (HW on the lane axis)
    acc_ref: (tb, C) f32 running spatial sum (persists across the hw axis)
    o_ref : (tb, out) written only on the last hw step
    """
    j = pl.program_id(1)

    @pl.when(j == 0)
    def _init():
        acc_ref[...] = jnp.zeros_like(acc_ref)

    x = x_ref[...].astype(jnp.float32)
    if need_mask:
        # Zero out spatial positions that fall past H*W (ragged last hw block).
        col = lax.broadcasted_iota(jnp.int32, x.shape, 2)
        x = jnp.where(j * hw_tile + col < hw_total, x, 0.0)
    acc_ref[...] += jnp.sum(x, axis=-1)                       # lane-axis reduce

    @pl.when(j == pl.num_programs(1) - 1)
    def _finalize():
        # AdaptiveAvgPool2d(1) + Flatten
        pooled = acc_ref[...] * (1.0 / float(hw_total))
        # Dropout(0.2) -> identity in eval mode.
        h = jnp.dot(pooled, w1_ref[...],
                    preferred_element_type=jnp.float32) + b1_ref[...]
        h = h * jax.nn.sigmoid(h)                             # SiLU
        # Dropout(0.2) -> identity in eval mode.
        y = jnp.dot(h, w2_ref[...],
                    preferred_element_type=jnp.float32) + b2_ref[...]
        o_ref[...] = jax.nn.sigmoid(y).astype(o_ref.dtype)


def _choose_tiles(B, C, HW, elem_bytes, target_block_bytes):
    """Pick (batch_tile, hw_tile) so one x block is ~target_block_bytes."""
    row_bytes = C * HW * elem_bytes          # one batch row, full spatial extent
    if row_bytes <= target_block_bytes:
        hw_tile = HW                         # full extent -> no masking needed
        tb = min(B, max(1, target_block_bytes // row_bytes))
        if tb < B:
            # keep the output/accumulator block sublane-aligned
            tb = min(B, max(8, (tb // 8) * 8))
    else:
        tb = B if B < 8 else 8
        per_hw_bytes = C * elem_bytes * tb
        hw_tile = max(128, (target_block_bytes // per_hw_bytes) // 128 * 128)
        hw_tile = min(hw_tile, pl.cdiv(HW, 128) * 128)
    return tb, hw_tile


def cls_head_forward(x_nchw, w1_t, b1, w2_t, b2, *,
                     batch_tile=None, hw_tile=None,
                     target_block_bytes=8 << 20):
    """x_nchw: (B, C, H, W); w1_t: (C, C//2); b1: (C//2,) or (1, C//2);
    w2_t: (C//2, out); b2: (out,) or (1, out). Returns (B, out) f32."""
    B, C, H, W = x_nchw.shape
    HW = H * W
    hid = w1_t.shape[1]
    out_dim = w2_t.shape[1]

    # Native contiguous layout: (B, C, H, W) -> (B, C, H*W) is a free reshape.
    x = x_nchw.reshape(B, C, HW)
    elem_bytes = jnp.dtype(x.dtype).itemsize

    tb_auto, thw_auto = _choose_tiles(B, C, HW, elem_bytes, target_block_bytes)
    tb = batch_tile if batch_tile is not None else tb_auto
    thw = hw_tile if hw_tile is not None else thw_auto
    need_mask = (HW % thw) != 0

    grid = (pl.cdiv(B, tb), pl.cdiv(HW, thw))

    # Biases as (1, n) rows so they broadcast along the lane axis in-kernel.
    w1f = w1_t.astype(jnp.float32)
    w2f = w2_t.astype(jnp.float32)
    b1r = b1.reshape(1, hid).astype(jnp.float32)
    b2r = b2.reshape(1, out_dim).astype(jnp.float32)

    kernel = functools.partial(_cls_head_kernel, hw_total=HW, hw_tile=thw,
                               need_mask=need_mask)

    # Explicit VMEM budget: 2x double-buffered x block + params + scratch + slack.
    x_block_bytes = tb * C * thw * elem_bytes
    param_bytes = (C * hid + hid + hid * out_dim + out_dim) * 4
    acc_bytes = tb * C * 4
    out_bytes = tb * out_dim * 4
    vmem_limit = max(32 << 20,
                     min(100 << 20,
                         2 * x_block_bytes + 2 * (param_bytes + out_bytes)
                         + acc_bytes + (4 << 20)))

    return pl.pallas_call(
        kernel,
        out_shape=jax.ShapeDtypeStruct((B, out_dim), jnp.float32),
        grid=grid,
        in_specs=[
            pl.BlockSpec((tb, C, thw), lambda i, j: (i, 0, j)),   # x stream
            pl.BlockSpec((C, hid), lambda i, j: (0, 0)),          # W1 (resident)
            pl.BlockSpec((1, hid), lambda i, j: (0, 0)),          # b1
            pl.BlockSpec((hid, out_dim), lambda i, j: (0, 0)),    # W2
            pl.BlockSpec((1, out_dim), lambda i, j: (0, 0)),      # b2
        ],
        out_specs=pl.BlockSpec((tb, out_dim), lambda i, j: (i, 0)),
        scratch_shapes=[pltpu.VMEM((tb, C), jnp.float32)],        # spatial-sum acc
        compiler_params=pltpu.CompilerParams(
            dimension_semantics=("parallel", "arbitrary"),
            vmem_limit_bytes=int(vmem_limit),
        ),
    )(x, w1f, b1r, w2f, b2r)


def _reference(x_nchw, w1_t, b1, w2_t, b2):
    pooled = jnp.mean(x_nchw, axis=(2, 3))            # (B, C)
    h = pooled @ w1_t + b1.reshape(1, -1)             # (B, C//2)
    h = h * jax.nn.sigmoid(h)                         # SiLU
    y = h @ w2_t + b2.reshape(1, -1)                  # (B, out)
    return jax.nn.sigmoid(y)


if __name__ == "__main__":
    # Small shapes: batch=2, in_=32 channels, spatial=16x16, out_=8 classes.
    B, C, H, W = 2, 32, 16, 16
    in_ = C
    hid = in_ // 2
    out_ = 8

    key = jax.random.PRNGKey(0)
    kx, kw1, kb1, kw2, kb2 = jax.random.split(key, 5)

    x = jax.random.normal(kx, (B, C, H, W), dtype=jnp.float32)

    # PyTorch Linear shapes: weight (out,in), bias (out,). Store pre-transposed.
    w1 = jax.random.normal(kw1, (hid, in_), dtype=jnp.float32) * 0.1
    b1 = jax.random.normal(kb1, (hid,), dtype=jnp.float32) * 0.1
    w2 = jax.random.normal(kw2, (out_, hid), dtype=jnp.float32) * 0.1
    b2 = jax.random.normal(kb2, (out_,), dtype=jnp.float32) * 0.1
    w1_t = w1.T                                       # (in_, hid)
    w2_t = w2.T                                       # (hid, out_)

    y_ref = _reference(x, w1_t, b1, w2_t, b2)

    # 1) Default auto tiling (small shapes -> single grid step).
    y = jax.block_until_ready(cls_head_forward(x, w1_t, b1, w2_t, b2))
    assert y.shape == (B, out_)
    assert jnp.allclose(y, y_ref, atol=1e-5, rtol=1e-5), "mismatch (auto tiling)"

    # 2) Forced small spatial tile -> exercises the multi-step accumulator path.
    y2 = jax.block_until_ready(
        cls_head_forward(x, w1_t, b1, w2_t, b2, hw_tile=128))
    assert jnp.allclose(y2, y_ref, atol=1e-5, rtol=1e-5), "mismatch (tiled HW)"

    # 3) Ragged spatial extent (12x12 = 144) with a 128-wide tile -> masked path.
    x3 = jax.random.normal(kx, (B, C, 12, 12), dtype=jnp.float32)
    y3_ref = _reference(x3, w1_t, b1, w2_t, b2)
    y3 = jax.block_until_ready(
        cls_head_forward(x3, w1_t, b1, w2_t, b2, hw_tile=128))
    assert jnp.allclose(y3, y3_ref, atol=1e-5, rtol=1e-5), "mismatch (masked HW)"

    print("KERNEL_OK")
</pallas_src>

<mosaic_0001>
module attributes {stable_mosaic.version = 11 : i64} {
  func.func @_cls_head_kernel(%arg0: i32, %arg1: i32, %arg2: memref<2x32x256xf32, #tpu.memory_space<vmem>>, %arg3: memref<32x16xf32, #tpu.memory_space<vmem>>, %arg4: memref<1x16xf32, #tpu.memory_space<vmem>>, %arg5: memref<16x8xf32, #tpu.memory_space<vmem>>, %arg6: memref<1x8xf32, #tpu.memory_space<vmem>>, %arg7: memref<2x8xf32, #tpu.memory_space<vmem>>, %arg8: memref<2x32xf32, #tpu.memory_space<vmem>>) attributes {dimension_semantics = [#tpu.dimension_semantics<parallel>, #tpu.dimension_semantics<arbitrary>], iteration_bounds = array<i64: 1, 1>, scalar_prefetch = 0 : i64, scratch_operands = 1 : i64, tpu.core_type = #tpu.core_type<tc>, window_params = [{transform_indices = @transform_0, window_bounds = array<i64: 2, 32, 256>}, {pipeline_mode = #tpu.pipeline_mode<synchronous>, transform_indices = @transform_1, window_bounds = array<i64: 32, 16>}, {pipeline_mode = #tpu.pipeline_mode<synchronous>, transform_indices = @transform_2, window_bounds = array<i64: 1, 16>}, {pipeline_mode = #tpu.pipeline_mode<synchronous>, transform_indices = @transform_3, window_bounds = array<i64: 16, 8>}, {pipeline_mode = #tpu.pipeline_mode<synchronous>, transform_indices = @transform_4, window_bounds = array<i64: 1, 8>}, {transform_indices = @transform_5, window_bounds = array<i64: 2, 8>}]} {
    %c0_i32 = arith.constant 0 : i32
    %0 = arith.cmpi eq, %arg1, %c0_i32 : i32
    %1 = arith.extui %0 : i1 to i32
    %c0_i32_0 = arith.constant 0 : i32
    %2 = arith.cmpi ne, %1, %c0_i32_0 : i32
    scf.if %2 {
      %cst_9 = arith.constant 0.000000e+00 : f32
      %11 = vector.broadcast %cst_9 : f32 to vector<2x32xf32>
      %c0_10 = arith.constant 0 : index
      %c0_11 = arith.constant 0 : index
      %12 = vector.load %arg8[%c0_10, %c0_11] : memref<2x32xf32, #tpu.memory_space<vmem>>, vector<2x32xf32>
      tpu.vector_store %arg8[%c0_10, %c0_11], %11 {strides = array<i32>} : memref<2x32xf32, #tpu.memory_space<vmem>>, vector<2x32xf32>,
    } else {
    }
    %c0 = arith.constant 0 : index
    %c0_1 = arith.constant 0 : index
    %c0_2 = arith.constant 0 : index
    %3 = vector.load %arg2[%c0, %c0_1, %c0_2] : memref<2x32x256xf32, #tpu.memory_space<vmem>>, vector<2x32x256xf32>
    %c0_3 = arith.constant 0 : index
    %c0_4 = arith.constant 0 : index
    %4 = vector.load %arg8[%c0_3, %c0_4] : memref<2x32xf32, #tpu.memory_space<vmem>>, vector<2x32xf32>
    %cst = arith.constant dense<0.000000e+00> : vector<2x32xf32>
    %5 = vector.multi_reduction <add>, %3, %cst [2] : vector<2x32x256xf32> to vector<2x32xf32>
    %6 = arith.addf %4, %5 : vector<2x32xf32>
    %c0_5 = arith.constant 0 : index
    %c0_6 = arith.constant 0 : index
    %7 = vector.load %arg8[%c0_5, %c0_6] : memref<2x32xf32, #tpu.memory_space<vmem>>, vector<2x32xf32>
    tpu.vector_store %arg8[%c0_5, %c0_6], %6 {strides = array<i32>} : memref<2x32xf32, #tpu.memory_space<vmem>>, vector<2x32xf32>,
    %c0_i32_7 = arith.constant 0 : i32
    %8 = arith.cmpi eq, %arg1, %c0_i32_7 : i32
    %9 = arith.extui %8 : i1 to i32
    %c0_i32_8 = arith.constant 0 : i32
    %10 = arith.cmpi ne, %9, %c0_i32_8 : i32
    scf.if %10 {
      %c0_9 = arith.constant 0 : index
      %c0_10 = arith.constant 0 : index
      %11 = vector.load %arg8[%c0_9, %c0_10] : memref<2x32xf32, #tpu.memory_space<vmem>>, vector<2x32xf32>
      %cst_11 = arith.constant 3.906250e-03 : f32
      %12 = vector.broadcast %cst_11 : f32 to vector<2x32xf32>
      %13 = arith.mulf %11, %12 : vector<2x32xf32>
      %c0_12 = arith.constant 0 : index
      %c0_13 = arith.constant 0 : index
      %14 = vector.load %arg3[%c0_12, %c0_13] : memref<32x16xf32, #tpu.memory_space<vmem>>, vector<32x16xf32>
      %cst_14 = arith.constant dense<0.000000e+00> : vector<2x16xf32>
      %15 = tpu.matmul %13, %14, %cst_14 {dimension_numbers = #tpu.dot_dimension_numbers<[1], [0], [0], [1], [0, 0, 1, 1], [], []>} : vector<2x32xf32>, vector<32x16xf32>, vector<2x16xf32> -> vector<2x16xf32>
      %c0_15 = arith.constant 0 : index
      %c0_16 = arith.constant 0 : index
      %16 = vector.load %arg4[%c0_15, %c0_16] : memref<1x16xf32, #tpu.memory_space<vmem>>, vector<1x16xf32>
      %17 = vector.broadcast %16 : vector<1x16xf32> to vector<2x16xf32>
      %18 = arith.addf %15, %17 : vector<2x16xf32>
      %19 = arith.negf %18 : vector<2x16xf32>
      %20 = math.exp %19 : vector<2x16xf32>
      %cst_17 = arith.constant 1.000000e+00 : f32
      %21 = vector.broadcast %cst_17 : f32 to vector<2x16xf32>
      %22 = arith.addf %21, %20 : vector<2x16xf32>
      %23 = arith.divf %21, %22 : vector<2x16xf32>
      %24 = arith.mulf %18, %23 : vector<2x16xf32>
      %c0_18 = arith.constant 0 : index
      %c0_19 = arith.constant 0 : index
      %25 = vector.load %arg5[%c0_18, %c0_19] : memref<16x8xf32, #tpu.memory_space<vmem>>, vector<16x8xf32>
      %cst_20 = arith.constant dense<0.000000e+00> : vector<2x8xf32>
      %26 = tpu.matmul %24, %25, %cst_20 {dimension_numbers = #tpu.dot_dimension_numbers<[1], [0], [0], [1], [0, 0, 1, 1], [], []>} : vector<2x16xf32>, vector<16x8xf32>, vector<2x8xf32> -> vector<2x8xf32>
      %c0_21 = arith.constant 0 : index
      %c0_22 = arith.constant 0 : index
      %27 = vector.load %arg6[%c0_21, %c0_22] : memref<1x8xf32, #tpu.memory_space<vmem>>, vector<1x8xf32>
      %28 = vector.broadcast %27 : vector<1x8xf32> to vector<2x8xf32>
      %29 = arith.addf %26, %28 : vector<2x8xf32>
      %30 = arith.negf %29 : vector<2x8xf32>
      %31 = math.exp %30 : vector<2x8xf32>
      %cst_23 = arith.constant 1.000000e+00 : f32
      %32 = vector.broadcast %cst_23 : f32 to vector<2x8xf32>
      %33 = arith.addf %32, %31 : vector<2x8xf32>
      %34 = arith.divf %32, %33 : vector<2x8xf32>
      %c0_24 = arith.constant 0 : index
      %c0_25 = arith.constant 0 : index
      %35 = vector.load %arg7[%c0_24, %c0_25] : memref<2x8xf32, #tpu.memory_space<vmem>>, vector<2x8xf32>
      tpu.vector_store %arg7[%c0_24, %c0_25], %34 {strides = array<i32>} : memref<2x8xf32, #tpu.memory_space<vmem>>, vector<2x8xf32>,
    } else {
    }
    return
  }
  func.func @transform_0(%arg0: i32, %arg1: i32) -> (i32, i32, i32) {
    %c0_i32 = arith.constant 0 : i32
    %c0_i32_0 = arith.constant 0 : i32
    return %arg0, %c0_i32, %arg1 : i32, i32, i32
  }
  func.func @transform_1(%arg0: i32, %arg1: i32) -> (i32, i32) {
    %c0_i32 = arith.constant 0 : i32
    %c0_i32_0 = arith.constant 0 : i32
    %c0_i32_1 = arith.constant 0 : i32
    return %c0_i32, %c0_i32_0 : i32, i32
  }
  func.func @transform_2(%arg0: i32, %arg1: i32) -> (i32, i32) {
    %c0_i32 = arith.constant 0 : i32
    %c0_i32_0 = arith.constant 0 : i32
    %c0_i32_1 = arith.constant 0 : i32
    return %c0_i32, %c0_i32_0 : i32, i32
  }
  func.func @transform_3(%arg0: i32, %arg1: i32) -> (i32, i32) {
    %c0_i32 = arith.constant 0 : i32
    %c0_i32_0 = arith.constant 0 : i32
    %c0_i32_1 = arith.constant 0 : i32
    return %c0_i32, %c0_i32_0 : i32, i32
  }
  func.func @transform_4(%arg0: i32, %arg1: i32) -> (i32, i32) {
    %c0_i32 = arith.constant 0 : i32
    %c0_i32_0 = arith.constant 0 : i32
    %c0_i32_1 = arith.constant 0 : i32
    return %c0_i32, %c0_i32_0 : i32, i32
  }
  func.func @transform_5(%arg0: i32, %arg1: i32) -> (i32, i32) {
    %c0_i32 = arith.constant 0 : i32
    %c0_i32_0 = arith.constant 0 : i32
    return %arg0, %c0_i32 : i32, i32
  }
}

</mosaic_0001>

<llo_original>
// kernel: tpu_custom_call.1
$region0: #{tpu_custom_call.1}
  #allocation0 [shape = 'u32[]', space=smem, size = 0x4, offset = 0x4, fixed_abs, tag = 'smem constant byte address 0x4 - core index']
  #allocation1 [shape = 'u32[144,128]{1,0:T(1,128)}', space=vmem, size = 0x12000, scoped, tag = 'internal scratch']
  #allocation2 [shape = 'f32[2,32]{1,0:T(2,128)}', space=vmem, size = 0x400, scoped, tag = 'scratch operand']
  %s0 = inlined_call_operand.hbm [shape: f32[2,32,256], index: 0, kind: input, shape index: {}]
  %s1 = inlined_call_operand.vmem [shape: f32[32,16], index: 1, kind: input, shape index: {}]
  %s2 = inlined_call_operand.vmem [shape: f32[1,16], index: 2, kind: input, shape index: {}]
  %s3 = inlined_call_operand.vmem [shape: f32[16,8], index: 3, kind: input, shape index: {}]
  %s4 = inlined_call_operand.vmem [shape: f32[1,8], index: 4, kind: input, shape index: {}]
  %s5 = inlined_call_operand.hbm [shape: f32[2,8], index: 5, kind: output, shape index: {}]
  %s6 = sld [smem:[#allocation0]]
  $region42: #{tpu_custom_call.1} parent=0
    _
  %s8 = ssub.s32 1, %s6
  %s9 = scalar_select 0, %s8, %s6
  $region1: #{tpu_custom_call.1} parent=0
    #allocation3 [shape = 'u8[65536]{0}', space=vmem, size = 0x10000, scoped, tag = 'input window, operand 0, single buffered']
    #allocation4 [shape = 's32[1]{0}', space=sflag, size = 0x4, scoped, tag = 'scoped memory for tpu_custom_call.1']
    #allocation5 [shape = 's32[1]{0}', space=sflag, size = 0x4, scoped, tag = 'scoped memory for tpu_custom_call.1']
    #allocation6 [shape = 'u8[1024]{0}', space=vmem, size = 0x400, scoped, tag = 'output window, operand 0, single buffered']
    %10 = vsyncpa [#allocation4], 0
    %11 = vsyncpa [#allocation5], 0
    // Predicated region
    $region2: #{tpu_custom_call.1} parent=1 // pred_check
      _
    $region3: #{tpu_custom_call.1} parent=1 // pred_check_branch
      %13 = sbr.rel (0) target = $region5
    $region4: #{tpu_custom_call.1} parent=1 // pred_region
      %s15 = ssub.s32 2048, 2048
      %16 = vsyncadd [#allocation4], %s15
      %s17 = sshll.u32 [#allocation3], 4
      %s18 = int_to_ptr.vmem [resolvable:$true] %s17
      %23 = dma.hbm_to_vmem [thread:$0]  %s0, 2048, %s18, [#allocation4], 256, 256, 16
    $region5: #{tpu_custom_call.1} parent=1 // pred_fallthru
      _
    // Predicated region
    $region6: #{tpu_custom_call.1} parent=1 // pred_check
      _
    $region7: #{tpu_custom_call.1} parent=1 // pred_check_branch
      %25 = sbr.rel (0) target = $region9
    $region8: #{tpu_custom_call.1} parent=1 // pred_region
      _
    $region9: #{tpu_custom_call.1} parent=1 // pred_fallthru
      _
    // Predicated region
    $region10: #{tpu_custom_call.1} parent=1 // pred_check
      _
    $region11: #{tpu_custom_call.1} parent=1 // pred_check_branch
      %27 = sbr.rel (0) target = $region13
    $region12: #{tpu_custom_call.1} parent=1 // pred_region
      _
    $region13: #{tpu_custom_call.1} parent=1 // pred_fallthru
      _
    // Predicated region
    $region14: #{tpu_custom_call.1} parent=1 // pred_check
      _
    $region15: #{tpu_custom_call.1} parent=1 // pred_check_branch
      %29 = sbr.rel (0) target = $region17
    $region16: #{tpu_custom_call.1} parent=1 // pred_region
      _
    $region17: #{tpu_custom_call.1} parent=1 // pred_fallthru
      _
    // Predicated region
    $region18: #{tpu_custom_call.1} parent=1 // pred_check
      _
    $region19: #{tpu_custom_call.1} parent=1 // pred_check_branch
      %31 = sbr.rel (0) target = $region21
    $region20: #{tpu_custom_call.1} parent=1 // pred_region
      _
    $region21: #{tpu_custom_call.1} parent=1 // pred_fallthru
      _
    // Predicated region
    $region22: #{tpu_custom_call.1} parent=1 // pred_check
      _
    $region23: #{tpu_custom_call.1} parent=1 // pred_check_branch
      %33 = sbr.rel (0) target = $region25
    $region24: #{tpu_custom_call.1} parent=1 // pred_region
      %34 = dma.done [#allocation4], 2048
    $region25: #{tpu_custom_call.1} parent=1 // pred_fallthru
      _
    %p35 = scmp.eq.s32.totalorder 0, 0
    // Predicated region
    $region26: #{tpu_custom_call.1} parent=1 // pred_check
      %p36 = pneg %p35
    $region27: #{tpu_custom_call.1} parent=1 // pred_check_branch
      %38 = sbr.rel (%p36) target = $region29
    $region28: #{tpu_custom_call.1} parent=1 // pred_region
      %vm39 = vcmask 254976
      %40 = vst.msk [vmem:[#allocation2] sm:$0x3] %vm39, 0.0
    $region29: #{tpu_custom_call.1} parent=1 // pred_fallthru
      _
    %v41 = vld [vmem:[#allocation3] sm:$0xff]
    %v42 = vld [vmem:[#allocation3 + $0x8] sm:$0xff]
    %v43 = vld [vmem:[#allocation3 + $0x10] sm:$0xff]
    %v44 = vld [vmem:[#allocation3 + $0x18] sm:$0xff]
    %v45 = vld [vmem:[#allocation3 + $0x20] sm:$0xff]
    %v46 = vld [vmem:[#allocation3 + $0x28] sm:$0xff]
    %v47 = vld [vmem:[#allocation3 + $0x30] sm:$0xff]
    %v48 = vld [vmem:[#allocation3 + $0x38] sm:$0xff]
    %v49 = vld [vmem:[#allocation3 + $0x40] sm:$0xff]
    %v50 = vld [vmem:[#allocation3 + $0x48] sm:$0xff]
    %v51 = vld [vmem:[#allocation3 + $0x50] sm:$0xff]
    %v52 = vld [vmem:[#allocation3 + $0x58] sm:$0xff]
    %v53 = vld [vmem:[#allocation3 + $0x60] sm:$0xff]
    %v54 = vld [vmem:[#allocation3 + $0x68] sm:$0xff]
    %v55 = vld [vmem:[#allocation3 + $0x70] sm:$0xff]
    %v56 = vld [vmem:[#allocation3 + $0x78] sm:$0xff]
    %v57 = vld [vmem:[#allocation2] sm:$0x3]
    %v58 = vadd.f32 %v41, %v42
    %59 = vadd.xlane.f32.xlu0 %v58
    %v60 = vpop.xlane.xlu0 %59
    %v61 = vadd.f32 %v43, %v44
    %62 = vadd.xlane.f32.xlu0 %v61
    %v63 = vpop.xlane.xlu0 %62
    %v64 = vadd.f32 %v45, %v46
    %65 = vadd.xlane.f32.xlu0 %v64
    %v66 = vpop.xlane.xlu0 %65
    %v67 = vadd.f32 %v47, %v48
    %68 = vadd.xlane.f32.xlu0 %v67
    %v69 = vpop.xlane.xlu0 %68
    %v70 = vadd.f32 %v49, %v50
    %71 = vadd.xlane.f32.xlu0 %v70
    %v72 = vpop.xlane.xlu0 %71
    %v73 = vadd.f32 %v51, %v52
    %74 = vadd.xlane.f32.xlu0 %v73
    %v75 = vpop.xlane.xlu0 %74
    %v76 = vadd.f32 %v53, %v54
    %77 = vadd.xlane.f32.xlu0 %v76
    %v78 = vpop.xlane.xlu0 %77
    %v79 = vadd.f32 %v55, %v56
    %80 = vadd.xlane.f32.xlu0 %v79
    %v81 = vpop.xlane.xlu0 %80
    %v90 = vlaneseq
    %v91 = vand.u32 %v90, 127
    %v92 = vlaneseq
    %v93 = vshrl.u32 %v92, 7
    %v94 = vsub.s32 %v91, %v93
    %v95 = vrot.slane %v60, %v94
    %v96 = vadd.s32 %v91, 4294967288
    %v97 = vlaneseq
    %v98 = vshrl.u32 %v97, 7
    %v99 = vsub.s32 %v96, %v98
    %v100 = vrot.slane %v63, %v99
    %vm101 = vcmask 130112
    %v102 = vsel %vm101, %v100, %v95
    %v103 = vadd.s32 %v91, 4294967280
    %v104 = vlaneseq
    %v105 = vshrl.u32 %v104, 7
    %v106 = vsub.s32 %v103, %v105
    %v107 = vrot.slane %v66, %v106
    %vm108 = vcmask 195712
    %v109 = vsel %vm108, %v107, %v102
    %v110 = vadd.s32 %v91, 4294967272
    %v111 = vlaneseq
    %v112 = vshrl.u32 %v111, 7
    %v113 = vsub.s32 %v110, %v112
    %v114 = vrot.slane %v69, %v113
    %vm115 = vcmask 261312
    %v116 = vsel %vm115, %v114, %v109
    %v117 = vlaneseq
    %v118 = vshrl.u32 %v117, 7
    %v119 = vsub.s32 %v91, %v118
    %v120 = vrot.slane %v72, %v119
    %v121 = vlaneseq
    %v122 = vshrl.u32 %v121, 7
    %v123 = vsub.s32 %v96, %v122
    %v124 = vrot.slane %v75, %v123
    %v125 = vsel %vm101, %v124, %v120
    %v126 = vlaneseq
    %v127 = vshrl.u32 %v126, 7
    %v128 = vsub.s32 %v103, %v127
    %v129 = vrot.slane %v78, %v128
    %v130 = vsel %vm108, %v129, %v125
    %v131 = vlaneseq
    %v132 = vshrl.u32 %v131, 7
    %v133 = vsub.s32 %v110, %v132
    %v134 = vrot.slane %v81, %v133
    %v135 = vsel %vm115, %v134, %v130
    %vm136 = vcmask 1041409
    %v137 = vsel %vm136, %v135, %v116
    %v139 = vadd.f32 %v57, %v137
    %vm140 = vcmask 254976
    %141 = vst.msk [vmem:[#allocation2] sm:$0x3] %vm140, %v139
    // Predicated region
    $region30: #{tpu_custom_call.1} parent=1 // pred_check
      %p142 = pneg %p35
    $region31: #{tpu_custom_call.1} parent=1 // pred_check_branch
      %144 = sbr.rel (%p142) target = $region33
    $region32: #{tpu_custom_call.1} parent=1 // pred_region
      %v145 = vld [vmem:[#allocation2] sm:$0x3]
      %v146 = vmul.f32 %v145, 0.00390625
      %v147 = vld [vmem:[%s1] sm:$0xff]
      %v148 = vld [vmem:[%s1 + $0x8] sm:$0xff]
      %v149 = vld [vmem:[%s1 + $0x10] sm:$0xff]
      %v150 = vld [vmem:[%s1 + $0x18] sm:$0xff]
      %v151 = vld [vmem:[%s2] sm:$0x1]
      %v153 = vlaneseq
      %v154 = vshrl.u32 %v153, 7
      %v155 = vsub.s32 0, %v154
      %v156 = vrot.slane %v151, %v155
      %vm158 = vcmask 261120
      %v160 = vsel %vm158, %v146, 0
      %162 = vmatprep.subr.mxu0 0.0
      %163 = vmatpush1.msra.mxu0 %v147
      %164 = vmatprep.subr.mxu0 0.0
      %165 = vmatpush1.msra.mxu0 %v148
      %166 = vmatprep.subr.mxu0 0.0
      %167 = vmatpush1.msra.mxu0 %v149
      %168 = vmatprep.subr.mxu0 0.0
      %169 = vmatpush1.msra.mxu0 %v150
      %170 = vmatprep.subr.mxu0 0.0
      %171 = vmatpush1.msra.mxu0 0.0
      %172 = vmatprep.subr.mxu0 0.0
      %173 = vmatpush1.msra.mxu0 0.0
      %174 = vmatprep.subr.mxu0 0.0
      %175 = vmatpush1.msra.mxu0 0.0
      %176 = vmatprep.subr.mxu0 0.0
      %177 = vmatpush1.msra.mxu0 0.0
      %178 = vmatprep.subr.mxu0 0.0
      %179 = vmatpush1.msra.mxu0 0.0
      %180 = vmatprep.subr.mxu0 0.0
      %181 = vmatpush1.msra.mxu0 0.0
      %182 = vmatprep.subr.mxu0 0.0
      %183 = vmatpush1.msra.mxu0 0.0
      %184 = vmatprep.subr.mxu0 0.0
      %185 = vmatpush1.msra.mxu0 0.0
      %186 = vmatprep.subr.mxu0 0.0
      %187 = vmatpush1.msra.mxu0 0.0
      %188 = vmatprep.subr.mxu0 0.0
      %189 = vmatpush1.msra.mxu0 0.0
      %190 = vmatprep.subr.mxu0 0.0
      %191 = vmatpush1.msra.mxu0 0.0
      %192 = vmatprep.subr.mxu0 0.0
      %193 = vmatpush1.msra.mxu0 0.0
      %194 = vmatprep.subr.mxu0 0.0
      %195 = vmatpush1.msra.mxu0 0.0
      %196 = vmatprep.subr.mxu0 0.0
      %197 = vmatpush1.msra.mxu0 0.0
      %198 = vmatprep.subr.mxu0 0.0
      %199 = vmatpush1.msra.mxu0 0.0
      %200 = vmatprep.subr.mxu0 0.0
      %201 = vmatpush1.msra.mxu0 0.0
      %202 = vmatprep.subr.mxu0 0.0
      %203 = vmatpush1.msra.mxu0 0.0
      %204 = vmatprep.subr.mxu0 0.0
      %205 = vmatpush1.msra.mxu0 0.0
      %206 = vmatprep.subr.mxu0 0.0
      %207 = vmatpush1.msra.mxu0 0.0
      %208 = vmatprep.subr.mxu0 0.0
      %209 = vmatpush1.msra.mxu0 0.0
      %210 = vmatprep.subr.mxu0 0.0
      %211 = vmatpush1.msra.mxu0 0.0
      %212 = vmatprep.subr.mxu0 0.0
      %213 = vmatpush1.msra.mxu0 0.0
      %214 = vmatprep.subr.mxu0 0.0
      %215 = vmatpush1.msra.mxu0 0.0
      %216 = vmatprep.subr.mxu0 0.0
      %217 = vmatpush1.msra.mxu0 0.0
      %218 = vmatprep.subr.mxu0 0.0
      %219 = vmatpush1.msra.mxu0 0.0
      %220 = vmatprep.subr.mxu0 0.0
      %221 = vmatpush1.msra.mxu0 0.0
      %222 = vmatprep.subr.mxu0 0.0
      %223 = vmatpush1.msra.mxu0 0.0
      %224 = vmatprep.subr.mxu0 0.0
      %225 = vmatpush1.msra.mxu0 0.0
      %226 = vmatprep.mubr.f32.mxu0 0.0
      %227 = vmatmul.mubr.f32.gmra.mrb[0].mxu0 %v160
      %v228 = vpop.f32.mrb[0].mxu0
      %v229 = vadd.f32 %v156, %v228
      %v230 = vpop.f32.mrb[0].mxu0
      %231 = vdwg.mxu0
      %v232 = vxor.u32 %v229, 2147483648
      %v233 = vmul.f32 %v232, 1.442695
      %v234 = vpow.pop %v233
      %v235 = vadd.f32 %v234, 1.0
      %v236 = vrcp.pop %v235
      %v237 = vmul.f32 1.0, %v236
      %v238 = vmul.f32 %v229, %v237
      %v239 = vld [vmem:[%s3] sm:$0xff]
      %v240 = vld [vmem:[%s3 + $0x8] sm:$0xff]
      %v241 = vld [vmem:[%s4] sm:$0x1]
      %v243 = vlaneseq
      %v244 = vshrl.u32 %v243, 7
      %v245 = vsub.s32 0, %v244
      %v246 = vrot.slane %v241, %v245
      %vm248 = vcmask 130048
      %v250 = vsel %vm248, %v238, 0
      %252 = vmatprep.subr.mxu0 0.0
      %253 = vmatpush1.msra.mxu0 %v239
      %254 = vmatprep.subr.mxu0 0.0
      %255 = vmatpush1.msra.mxu0 %v240
      %256 = vmatprep.subr.mxu0 0.0
      %257 = vmatpush1.msra.mxu0 0.0
      %258 = vmatprep.subr.mxu0 0.0
      %259 = vmatpush1.msra.mxu0 0.0
      %260 = vmatprep.subr.mxu0 0.0
      %261 = vmatpush1.msra.mxu0 0.0
      %262 = vmatprep.subr.mxu0 0.0
      %263 = vmatpush1.msra.mxu0 0.0
      %264 = vmatprep.subr.mxu0 0.0
      %265 = vmatpush1.msra.mxu0 0.0
      %266 = vmatprep.subr.mxu0 0.0
      %267 = vmatpush1.msra.mxu0 0.0
      %268 = vmatprep.subr.mxu0 0.0
      %269 = vmatpush1.msra.mxu0 0.0
      %270 = vmatprep.subr.mxu0 0.0
      %271 = vmatpush1.msra.mxu0 0.0
      %272 = vmatprep.subr.mxu0 0.0
      %273 = vmatpush1.msra.mxu0 0.0
      %274 = vmatprep.subr.mxu0 0.0
      %275 = vmatpush1.msra.mxu0 0.0
      %276 = vmatprep.subr.mxu0 0.0
      %277 = vmatpush1.msra.mxu0 0.0
      %278 = vmatprep.subr.mxu0 0.0
      %279 = vmatpush1.msra.mxu0 0.0
      %280 = vmatprep.subr.mxu0 0.0
      %281 = vmatpush1.msra.mxu0 0.0
      %282 = vmatprep.subr.mxu0 0.0
      %283 = vmatpush1.msra.mxu0 0.0
      %284 = vmatprep.subr.mxu0 0.0
      %285 = vmatpush1.msra.mxu0 0.0
      %286 = vmatprep.subr.mxu0 0.0
      %287 = vmatpush1.msra.mxu0 0.0
      %288 = vmatprep.subr.mxu0 0.0
      %289 = vmatpush1.msra.mxu0 0.0
      %290 = vmatprep.subr.mxu0 0.0
      %291 = vmatpush1.msra.mxu0 0.0
      %292 = vmatprep.subr.mxu0 0.0
      %293 = vmatpush1.msra.mxu0 0.0
      %294 = vmatprep.subr.mxu0 0.0
      %295 = vmatpush1.msra.mxu0 0.0
      %296 = vmatprep.subr.mxu0 0.0
      %297 = vmatpush1.msra.mxu0 0.0
      %298 = vmatprep.subr.mxu0 0.0
      %299 = vmatpush1.msra.mxu0 0.0
      %300 = vmatprep.subr.mxu0 0.0
      %301 = vmatpush1.msra.mxu0 0.0
      %302 = vmatprep.subr.mxu0 0.0
      %303 = vmatpush1.msra.mxu0 0.0
      %304 = vmatprep.subr.mxu0 0.0
      %305 = vmatpush1.msra.mxu0 0.0
      %306 = vmatprep.subr.mxu0 0.0
      %307 = vmatpush1.msra.mxu0 0.0
      %308 = vmatprep.subr.mxu0 0.0
      %309 = vmatpush1.msra.mxu0 0.0
      %310 = vmatprep.subr.mxu0 0.0
      %311 = vmatpush1.msra.mxu0 0.0
      %312 = vmatprep.subr.mxu0 0.0
      %313 = vmatpush1.msra.mxu0 0.0
      %314 = vmatprep.subr.mxu0 0.0
      %315 = vmatpush1.msra.mxu0 0.0
      %316 = vmatprep.mubr.f32.mxu0 0.0
      %317 = vmatmul.mubr.f32.gmra.mrb[0].mxu0 %v250
      %v318 = vpop.f32.mrb[0].mxu0
      %v319 = vadd.f32 %v246, %v318
      %v320 = vpop.f32.mrb[0].mxu0
      %321 = vdwg.mxu0
      %v322 = vxor.u32 %v319, 2147483648
      %v323 = vmul.f32 %v322, 1.442695
      %v324 = vpow.pop %v323
      %v325 = vadd.f32 %v324, 1.0
      %v326 = vrcp.pop %v325
      %v327 = vmul.f32 1.0, %v326
      %vm328 = vcmask 58368
      %329 = vst.msk [vmem:[#allocation6] sm:$0x3] %vm328, %v327
    $region33: #{tpu_custom_call.1} parent=1 // pred_fallthru
      _
    // Predicated region
    $region34: #{tpu_custom_call.1} parent=1 // pred_check
      _
    $region35: #{tpu_custom_call.1} parent=1 // pred_check_branch
      %331 = sbr.rel (0) target = $region37
    $region36: #{tpu_custom_call.1} parent=1 // pred_region
      %s333 = ssub.s32 32, 32
      %334 = vsyncadd [#allocation5], %s333
      %s336 = sshll.u32 [#allocation6], 4
      %s337 = int_to_ptr.vmem [resolvable:$true] %s336
      %339 = dma.vmem_to_hbm [thread:$0]  %s337, 32, %s5, [#allocation5]
    $region37: #{tpu_custom_call.1} parent=1 // pred_fallthru
      _
    // Predicated region
    $region38: #{tpu_custom_call.1} parent=1 // pred_check
      _
    $region39: #{tpu_custom_call.1} parent=1 // pred_check_branch
      %341 = sbr.rel (0) target = $region41
    $region40: #{tpu_custom_call.1} parent=1 // pred_region
      %342 = dma.done [#allocation5], 32
    $region41: #{tpu_custom_call.1} parent=1 // pred_fallthru
      _
    %343 = vsyncpa [#allocation4], 1
    %344 = vsyncpa [#allocation5], 1

</llo_original>
